<compile_context>
chip_gen: v7x
topology: tpu7x:2x2x1
jax: 0.10.0
libtpu: 0.0.40
codegen_flags: <defaults>
</compile_context>

<pallas_src>
import numpy as np
import jax
import jax.numpy as jnp
from jax.experimental import pallas as pl
from jax.experimental.pallas import tpu as pltpu

TM_MAX = 512   # points per grid step (lane dimension) — mem-bound sweet spot


def _round8(c):
    return max(8, -(-int(c) // 8) * 8)


def _choose_tm(S):
    """Largest lane tile in {512, 256, 128} that still leaves >= 2 grid steps when S
    allows it.  Tiles are multiples of 128 so output stores stay unmasked."""
    tm = TM_MAX
    while tm > 128 and S < 2 * tm:
        tm //= 2
    return tm


# ---------------------------------------------------------------------------
# Pallas kernel: chained (1x1 conv + folded BN + ReLU) layers + max over K
# ---------------------------------------------------------------------------
def _make_mlp_kernel(num_layers, nsample):
    def kernel(x_ref, *refs):
        out_ref = refs[-1]
        params = refs[:-1]
        tm = x_ref.shape[-1]
        # Hoist weight/bias loads and bias lane-broadcasts out of the per-k unroll
        # (JAX does not CSE broadcast_in_dim).
        wl = [params[2 * l][...] for l in range(num_layers)]
        bl = [jnp.broadcast_to(params[2 * l + 1][...],
                               (params[2 * l].shape[0], tm))
              for l in range(num_layers)]

        def run_mlp(h):                       # h: (Ci_pad, TM) bf16
            for l in range(num_layers):
                acc = jnp.dot(wl[l], h, preferred_element_type=jnp.float32) + bl[l]
                acc = jnp.maximum(acc, 0.0)   # bias + ReLU epilogue in f32
                h = acc.astype(jnp.bfloat16) if l + 1 < num_layers else acc
            return h                          # (Co_last_pad, TM) f32

        # Static unroll over the (small) neighbor count; pooling is a VPU max tree.
        pooled = run_mlp(x_ref[0])
        for k in range(1, nsample):
            pooled = jnp.maximum(pooled, run_mlp(x_ref[k]))
        out_ref[...] = pooled.astype(out_ref.dtype)
    return kernel


def mlp_maxpool_pallas(x, weights, biases):
    """x: [K, Cin, S] (points-in-lanes layout; cast to bf16 internally).
    weights[l]: [Cin_l, Cout_l] f32 (BN already folded), biases[l]: [Cout_l] f32.
    Returns [Cout_last, S] f32 = max_K(ReLU(... ReLU(W0 x + b0) ...))."""
    K, Cin, S = x.shape
    L = len(weights)
    c_last = weights[-1].shape[1]

    # Rectangular per-layer channel padding (round up to 8 only).
    c_pads = [_round8(Cin)] + [_round8(w.shape[1]) for w in weights]

    TM = _choose_tm(S)
    n_steps = int(pl.cdiv(S, TM))
    if n_steps > 1 and n_steps % 2 == 1:
        n_steps += 1                          # even grid keeps both v7x TCs busy
    S_pad = n_steps * TM

    # Pad lanes/channels of the (already bf16 where possible) activation tensor.
    x_p = jnp.pad(x.astype(jnp.bfloat16),
                  ((0, 0), (0, c_pads[0] - Cin), (0, S_pad - S)))

    packed = []
    in_specs = [pl.BlockSpec((K, c_pads[0], TM), lambda i: (0, 0, i))]
    for l, (w, b) in enumerate(zip(weights, biases)):
        ci, co = w.shape
        ci_p, co_p = c_pads[l], c_pads[l + 1]
        packed.append(jnp.pad(w.T.astype(jnp.bfloat16),
                              ((0, co_p - co), (0, ci_p - ci))))      # (Co_p, Ci_p)
        packed.append(jnp.pad(b.astype(jnp.float32),
                              (0, co_p - co)).reshape(co_p, 1))        # (Co_p, 1)
        # Grid-invariant blocks: constant index_map -> no re-DMA across grid steps.
        in_specs.append(pl.BlockSpec((co_p, ci_p), lambda i: (0, 0)))
        in_specs.append(pl.BlockSpec((co_p, 1), lambda i: (0, 0)))

    out = pl.pallas_call(
        _make_mlp_kernel(L, K),
        out_shape=jax.ShapeDtypeStruct((c_pads[-1], S_pad), jnp.bfloat16),
        grid_spec=pltpu.PrefetchScalarGridSpec(
            num_scalar_prefetch=0,
            grid=(n_steps,),
            in_specs=in_specs,
            out_specs=pl.BlockSpec((c_pads[-1], TM), lambda i: (0, i)),
        ),
        compiler_params=pltpu.CompilerParams(
            dimension_semantics=("parallel",),
            vmem_limit_bytes=48 * 1024 * 1024),   # safe under v7x's 64 MiB physical
    )(x_p, *packed)
    # Padded lanes S..S_pad hold relu(bias) garbage; slice before any consumer.
    return out[:c_last, :S].astype(jnp.float32)


# ---------------------------------------------------------------------------
# Plain-JAX glue: FPS / ball query / gathers (data-dependent indexing)
# ---------------------------------------------------------------------------
def square_distance(src, dst):
    # src [B,M,3], dst [B,N,3] -> [B,M,N]
    return jnp.sum((src[:, :, None, :] - dst[:, None, :, :]) ** 2, axis=-1)


def index_points(points, idx):
    # points [B,N,C], idx [B,...] -> [B,...,C]
    return jax.vmap(lambda p, i: p[i])(points, idx)


def farthest_point_sample(xyz, npoint):
    # xyz [B,N,3] -> [B,npoint] int32.
    # TODO(synk): PyTorch seeds FPS with randint; we deterministically start at index 0.
    B, N, _ = xyz.shape

    def body(i, state):
        centroids, distance, farthest = state
        centroids = centroids.at[:, i].set(farthest)
        centroid = jnp.take_along_axis(xyz, farthest[:, None, None], axis=1)
        dist = jnp.sum((xyz - centroid) ** 2, axis=-1)
        distance = jnp.minimum(distance, dist)
        farthest = jnp.argmax(distance, axis=-1).astype(jnp.int32)
        return centroids, distance, farthest

    init = (jnp.zeros((B, npoint), jnp.int32),
            jnp.full((B, N), 1e10, jnp.float32),
            jnp.zeros((B,), jnp.int32))
    centroids, _, _ = jax.lax.fori_loop(0, npoint, body, init)
    return centroids


def query_ball_point(radius, nsample, xyz, new_xyz):
    # xyz [B,N,3], new_xyz [B,S,3] -> [B,S,nsample] int32
    B, N, _ = xyz.shape
    S = new_xyz.shape[1]
    sqrdists = square_distance(new_xyz, xyz)
    group_idx = jnp.broadcast_to(jnp.arange(N, dtype=jnp.int32), (B, S, N))
    group_idx = jnp.where(sqrdists > radius ** 2, N, group_idx)
    # nsample smallest (in-radius) indices without a full O(N log N) sort:
    neg_topk, _ = jax.lax.top_k(-group_idx, nsample)
    group_idx = -neg_topk                                   # ascending order
    group_first = jnp.broadcast_to(group_idx[:, :, :1], group_idx.shape)
    return jnp.where(group_idx == N, group_first, group_idx)


# ---------------------------------------------------------------------------
# Per-segment sample+group (plain JAX); MLP is batched across segments later.
# group_all=False path only.  TODO(synk): group_all=True path not implemented.
# ---------------------------------------------------------------------------
def sample_and_group(npoint, xy, xyz, points, *, radius, nsample):
    # xy [B,2,N], xyz [B,3,N], points [B,D,N]
    xyz_t = jnp.transpose(xyz, (0, 2, 1))
    xy_t = jnp.transpose(xy, (0, 2, 1))
    pts_t = jnp.transpose(points, (0, 2, 1))

    fps_idx = farthest_point_sample(xyz_t, npoint)             # [B,S]
    new_xyz = index_points(xyz_t, fps_idx)                     # [B,S,3]
    new_xy = index_points(xy_t, fps_idx)                       # [B,S,2]
    idx = query_ball_point(radius, nsample, xyz_t, new_xyz)    # [B,S,K]
    grouped_xyz = index_points(xyz_t, idx) - new_xyz[:, :, None, :]
    grouped_pts = index_points(pts_t, idx)                     # [B,S,K,D]
    feat = jnp.concatenate([grouped_xyz, grouped_pts], axis=-1)  # [B,S,K,3+D]
    return feat, new_xy, new_xyz


# ---------------------------------------------------------------------------
# PointNetpp forward: python loop over point_split segments for the data-
# dependent grouping, then ONE batched Pallas call for the MLP+max of all
# segments (weights are shared, so segments just stack along the points axis).
# ---------------------------------------------------------------------------
def pointnetpp_forward(xy, xyz, points, point_split, *, radius, nsample, ws, bs):
    B = xyz.shape[0]
    seg_feats, seg_npoints = [], []
    new_xy, new_xyz, split = [], [], [0]

    for i in range(len(point_split) - 1):
        start = int(point_split[i])
        end = int(point_split[i + 1])
        xyd = xy[:, :2, start:end]
        xyzd = xyz[:, :3, start:end]
        pointsd = points[:, :, start:end]
        n_points = end - start
        num_of_point = int(n_points // 2) + 2

        feat, l_xy, l_xyz = sample_and_group(
            num_of_point, xyd, xyzd, pointsd, radius=radius, nsample=nsample)
        Bf, S, K, C = feat.shape
        # bf16 cast + points-in-lanes transpose [K, C, B*S] done here, fused into
        # the existing per-segment reshape/concat (no dedicated padding pass).
        seg_feats.append(jnp.transpose(
            feat.astype(jnp.bfloat16).reshape(Bf * S, K, C), (1, 2, 0)))
        seg_npoints.append(S)
        new_xy.append(jnp.transpose(l_xy, (0, 2, 1)))       # [B,2,S]
        new_xyz.append(jnp.transpose(l_xyz, (0, 2, 1)))     # [B,3,S]
        split.append(split[-1] + S)

    # Single batched kernel launch for every segment's shared MLP + max-pool.
    all_feat = jnp.concatenate(seg_feats, axis=-1)            # [K, C, sum(B*S_i)] bf16
    all_out = mlp_maxpool_pallas(all_feat, ws, bs)            # [Cout, sum(B*S_i)] f32
    c_last = all_out.shape[0]

    new_points, off = [], 0
    for S in seg_npoints:
        seg = all_out[:, off:off + B * S].reshape(c_last, B, S).transpose(1, 0, 2)
        new_points.append(seg)                                # [B,Cout,S]
        off += B * S

    return (jnp.concatenate(new_xy, axis=-1),
            jnp.concatenate(new_xyz, axis=-1),
            jnp.concatenate(new_points, axis=-1),
            jnp.asarray(split, dtype=jnp.int32))


# ---------------------------------------------------------------------------
# Deterministic parameter init (Conv2d 1x1 + BatchNorm2d per mlp layer)
# ---------------------------------------------------------------------------
def init_sa_params(key, in_channel, mlp):
    params = []
    last = in_channel
    for out_c in mlp:
        key, k1, k2, k3, k4, k5 = jax.random.split(key, 6)
        params.append(dict(
            w=jax.random.normal(k1, (out_c, last), jnp.float32) / np.sqrt(last),
            b=0.01 * jax.random.normal(k2, (out_c,), jnp.float32),
            gamma=1.0 + 0.1 * jax.random.normal(k3, (out_c,), jnp.float32),
            beta=0.1 * jax.random.normal(k4, (out_c,), jnp.float32),
            mean=0.1 * jax.random.normal(k5, (out_c,), jnp.float32),
            var=jnp.ones((out_c,), jnp.float32)))
        last = out_c
    return params


def fold_bn(params, eps=1e-5):
    # TODO(synk): eval-mode BN fold only; training-mode batch-stat update not modeled.
    ws, bs = [], []
    for p in params:
        scale = p["gamma"] / jnp.sqrt(p["var"] + eps)
        ws.append((p["w"] * scale[:, None]).T)            # [Cin, Cout]
        bs.append((p["b"] - p["mean"]) * scale + p["beta"])
    return ws, bs


if __name__ == "__main__":
    key = jax.random.PRNGKey(0)
    B, N, D = 1, 32, 4
    radius, nsample = 0.4, 8
    mlp = [16, 32]
    in_channel = D + 3                      # grouped xyz-offsets ++ point feats

    k1, k2, k3, kp, kt = jax.random.split(key, 5)
    xyz = jax.random.uniform(k1, (B, 3, N), jnp.float32)
    xy = xyz[:, :2, :] + 0.01 * jax.random.normal(k2, (B, 2, N), jnp.float32)
    points = jax.random.normal(k3, (B, D, N), jnp.float32)
    point_split = np.array([0, 16, 32], dtype=np.int32)

    ws, bs = fold_bn(init_sa_params(kp, in_channel, mlp))

    # --- quick correctness check of the Pallas hot path vs a pure-JAX reference ---
    xt = jax.random.normal(kt, (20, nsample, in_channel), jnp.float32)   # [S,K,C]
    ref = xt
    for w, b in zip(ws, bs):
        ref = jnp.maximum(jnp.einsum("skc,cd->skd", ref, w) + b, 0.0)
    ref = jnp.max(ref, axis=1)                                           # [S,Cout]
    got = mlp_maxpool_pallas(jnp.transpose(xt, (1, 2, 0)), ws, bs).T     # [S,Cout]
    jax.block_until_ready(got)
    rel_err = float(jnp.max(jnp.abs(got - ref)) / (jnp.max(jnp.abs(ref)) + 1e-6))
    assert rel_err < 0.05, f"Pallas MLP mismatch: rel_err={rel_err}"

    # --- full forward ---
    out = pointnetpp_forward(xy, xyz, points, point_split,
                             radius=radius, nsample=nsample, ws=ws, bs=bs)
    jax.block_until_ready(out)

    new_xy, new_xyz, new_points, split = out
    assert new_xy.shape[:2] == (B, 2)
    assert new_xyz.shape[:2] == (B, 3)
    assert new_points.shape[:2] == (B, mlp[-1])
    assert new_xy.shape[2] == new_xyz.shape[2] == new_points.shape[2] == int(split[-1])
    print("KERNEL_OK")
</pallas_src>

<mosaic_0001>
module attributes {stable_mosaic.version = 11 : i64} {
  func.func @kernel(%arg0: i32, %arg1: memref<8x8x128xbf16, #tpu.memory_space<vmem>>, %arg2: memref<16x8xbf16, #tpu.memory_space<vmem>>, %arg3: memref<16x1xf32, #tpu.memory_space<vmem>>, %arg4: memref<32x16xbf16, #tpu.memory_space<vmem>>, %arg5: memref<32x1xf32, #tpu.memory_space<vmem>>, %arg6: memref<32x128xbf16, #tpu.memory_space<vmem>>) attributes {dimension_semantics = [#tpu.dimension_semantics<parallel>], iteration_bounds = array<i64: 1>, scalar_prefetch = 0 : i64, scratch_operands = 0 : i64, tpu.core_type = #tpu.core_type<tc>, window_params = [{transform_indices = @transform_0, window_bounds = array<i64: 8, 8, 128>}, {pipeline_mode = #tpu.pipeline_mode<synchronous>, transform_indices = @transform_1, window_bounds = array<i64: 16, 8>}, {pipeline_mode = #tpu.pipeline_mode<synchronous>, transform_indices = @transform_2, window_bounds = array<i64: 16, 1>}, {pipeline_mode = #tpu.pipeline_mode<synchronous>, transform_indices = @transform_3, window_bounds = array<i64: 32, 16>}, {pipeline_mode = #tpu.pipeline_mode<synchronous>, transform_indices = @transform_4, window_bounds = array<i64: 32, 1>}, {transform_indices = @transform_5, window_bounds = array<i64: 32, 128>}]} {
    %c0 = arith.constant 0 : index
    %c0_0 = arith.constant 0 : index
    %0 = vector.load %arg2[%c0, %c0_0] : memref<16x8xbf16, #tpu.memory_space<vmem>>, vector<16x8xbf16>
    %c0_1 = arith.constant 0 : index
    %c0_2 = arith.constant 0 : index
    %1 = vector.load %arg4[%c0_1, %c0_2] : memref<32x16xbf16, #tpu.memory_space<vmem>>, vector<32x16xbf16>
    %c0_3 = arith.constant 0 : index
    %c0_4 = arith.constant 0 : index
    %2 = vector.load %arg3[%c0_3, %c0_4] : memref<16x1xf32, #tpu.memory_space<vmem>>, vector<16x1xf32>
    %3 = vector.shape_cast %2 : vector<16x1xf32> to vector<16x1xf32>
    %4 = vector.broadcast %3 : vector<16x1xf32> to vector<16x128xf32>
    %c0_5 = arith.constant 0 : index
    %c0_6 = arith.constant 0 : index
    %5 = vector.load %arg5[%c0_5, %c0_6] : memref<32x1xf32, #tpu.memory_space<vmem>>, vector<32x1xf32>
    %6 = vector.shape_cast %5 : vector<32x1xf32> to vector<32x1xf32>
    %7 = vector.broadcast %6 : vector<32x1xf32> to vector<32x128xf32>
    %c0_7 = arith.constant 0 : index
    %c0_8 = arith.constant 0 : index
    %c0_9 = arith.constant 0 : index
    %8 = vector.load %arg1[%c0_7, %c0_8, %c0_9] : memref<8x8x128xbf16, #tpu.memory_space<vmem>>, vector<1x8x128xbf16>
    %9 = vector.shape_cast %8 : vector<1x8x128xbf16> to vector<8x128xbf16>
    %cst = arith.constant dense<0.000000e+00> : vector<16x128xf32>
    %10 = tpu.matmul %0, %9, %cst {dimension_numbers = #tpu.dot_dimension_numbers<[1], [0], [0], [1], [0, 0, 1, 1], [], []>} : vector<16x8xbf16>, vector<8x128xbf16>, vector<16x128xf32> -> vector<16x128xf32>
    %11 = arith.addf %10, %4 : vector<16x128xf32>
    %cst_10 = arith.constant 0.000000e+00 : f32
    %12 = vector.broadcast %cst_10 : f32 to vector<16x128xf32>
    %13 = arith.maximumf %11, %12 : vector<16x128xf32>
    %14 = arith.truncf %13 : vector<16x128xf32> to vector<16x128xbf16>
    %cst_11 = arith.constant dense<0.000000e+00> : vector<32x128xf32>
    %15 = tpu.matmul %1, %14, %cst_11 {dimension_numbers = #tpu.dot_dimension_numbers<[1], [0], [0], [1], [0, 0, 1, 1], [], []>} : vector<32x16xbf16>, vector<16x128xbf16>, vector<32x128xf32> -> vector<32x128xf32>
    %16 = arith.addf %15, %7 : vector<32x128xf32>
    %cst_12 = arith.constant 0.000000e+00 : f32
    %17 = vector.broadcast %cst_12 : f32 to vector<32x128xf32>
    %18 = arith.maximumf %16, %17 : vector<32x128xf32>
    %c1 = arith.constant 1 : index
    %c0_13 = arith.constant 0 : index
    %c0_14 = arith.constant 0 : index
    %19 = vector.load %arg1[%c1, %c0_13, %c0_14] : memref<8x8x128xbf16, #tpu.memory_space<vmem>>, vector<1x8x128xbf16>
    %20 = vector.shape_cast %19 : vector<1x8x128xbf16> to vector<8x128xbf16>
    %cst_15 = arith.constant dense<0.000000e+00> : vector<16x128xf32>
    %21 = tpu.matmul %0, %20, %cst_15 {dimension_numbers = #tpu.dot_dimension_numbers<[1], [0], [0], [1], [0, 0, 1, 1], [], []>} : vector<16x8xbf16>, vector<8x128xbf16>, vector<16x128xf32> -> vector<16x128xf32>
    %22 = arith.addf %21, %4 : vector<16x128xf32>
    %cst_16 = arith.constant 0.000000e+00 : f32
    %23 = vector.broadcast %cst_16 : f32 to vector<16x128xf32>
    %24 = arith.maximumf %22, %23 : vector<16x128xf32>
    %25 = arith.truncf %24 : vector<16x128xf32> to vector<16x128xbf16>
    %cst_17 = arith.constant dense<0.000000e+00> : vector<32x128xf32>
    %26 = tpu.matmul %1, %25, %cst_17 {dimension_numbers = #tpu.dot_dimension_numbers<[1], [0], [0], [1], [0, 0, 1, 1], [], []>} : vector<32x16xbf16>, vector<16x128xbf16>, vector<32x128xf32> -> vector<32x128xf32>
    %27 = arith.addf %26, %7 : vector<32x128xf32>
    %cst_18 = arith.constant 0.000000e+00 : f32
    %28 = vector.broadcast %cst_18 : f32 to vector<32x128xf32>
    %29 = arith.maximumf %27, %28 : vector<32x128xf32>
    %30 = arith.maximumf %18, %29 : vector<32x128xf32>
    %c2 = arith.constant 2 : index
    %c0_19 = arith.constant 0 : index
    %c0_20 = arith.constant 0 : index
    %31 = vector.load %arg1[%c2, %c0_19, %c0_20] : memref<8x8x128xbf16, #tpu.memory_space<vmem>>, vector<1x8x128xbf16>
    %32 = vector.shape_cast %31 : vector<1x8x128xbf16> to vector<8x128xbf16>
    %cst_21 = arith.constant dense<0.000000e+00> : vector<16x128xf32>
    %33 = tpu.matmul %0, %32, %cst_21 {dimension_numbers = #tpu.dot_dimension_numbers<[1], [0], [0], [1], [0, 0, 1, 1], [], []>} : vector<16x8xbf16>, vector<8x128xbf16>, vector<16x128xf32> -> vector<16x128xf32>
    %34 = arith.addf %33, %4 : vector<16x128xf32>
    %cst_22 = arith.constant 0.000000e+00 : f32
    %35 = vector.broadcast %cst_22 : f32 to vector<16x128xf32>
    %36 = arith.maximumf %34, %35 : vector<16x128xf32>
    %37 = arith.truncf %36 : vector<16x128xf32> to vector<16x128xbf16>
    %cst_23 = arith.constant dense<0.000000e+00> : vector<32x128xf32>
    %38 = tpu.matmul %1, %37, %cst_23 {dimension_numbers = #tpu.dot_dimension_numbers<[1], [0], [0], [1], [0, 0, 1, 1], [], []>} : vector<32x16xbf16>, vector<16x128xbf16>, vector<32x128xf32> -> vector<32x128xf32>
    %39 = arith.addf %38, %7 : vector<32x128xf32>
    %cst_24 = arith.constant 0.000000e+00 : f32
    %40 = vector.broadcast %cst_24 : f32 to vector<32x128xf32>
    %41 = arith.maximumf %39, %40 : vector<32x128xf32>
    %42 = arith.maximumf %30, %41 : vector<32x128xf32>
    %c3 = arith.constant 3 : index
    %c0_25 = arith.constant 0 : index
    %c0_26 = arith.constant 0 : index
    %43 = vector.load %arg1[%c3, %c0_25, %c0_26] : memref<8x8x128xbf16, #tpu.memory_space<vmem>>, vector<1x8x128xbf16>
    %44 = vector.shape_cast %43 : vector<1x8x128xbf16> to vector<8x128xbf16>
    %cst_27 = arith.constant dense<0.000000e+00> : vector<16x128xf32>
    %45 = tpu.matmul %0, %44, %cst_27 {dimension_numbers = #tpu.dot_dimension_numbers<[1], [0], [0], [1], [0, 0, 1, 1], [], []>} : vector<16x8xbf16>, vector<8x128xbf16>, vector<16x128xf32> -> vector<16x128xf32>
    %46 = arith.addf %45, %4 : vector<16x128xf32>
    %cst_28 = arith.constant 0.000000e+00 : f32
    %47 = vector.broadcast %cst_28 : f32 to vector<16x128xf32>
    %48 = arith.maximumf %46, %47 : vector<16x128xf32>
    %49 = arith.truncf %48 : vector<16x128xf32> to vector<16x128xbf16>
    %cst_29 = arith.constant dense<0.000000e+00> : vector<32x128xf32>
    %50 = tpu.matmul %1, %49, %cst_29 {dimension_numbers = #tpu.dot_dimension_numbers<[1], [0], [0], [1], [0, 0, 1, 1], [], []>} : vector<32x16xbf16>, vector<16x128xbf16>, vector<32x128xf32> -> vector<32x128xf32>
    %51 = arith.addf %50, %7 : vector<32x128xf32>
    %cst_30 = arith.constant 0.000000e+00 : f32
    %52 = vector.broadcast %cst_30 : f32 to vector<32x128xf32>
    %53 = arith.maximumf %51, %52 : vector<32x128xf32>
    %54 = arith.maximumf %42, %53 : vector<32x128xf32>
    %c4 = arith.constant 4 : index
    %c0_31 = arith.constant 0 : index
    %c0_32 = arith.constant 0 : index
    %55 = vector.load %arg1[%c4, %c0_31, %c0_32] : memref<8x8x128xbf16, #tpu.memory_space<vmem>>, vector<1x8x128xbf16>
    %56 = vector.shape_cast %55 : vector<1x8x128xbf16> to vector<8x128xbf16>
    %cst_33 = arith.constant dense<0.000000e+00> : vector<16x128xf32>
    %57 = tpu.matmul %0, %56, %cst_33 {dimension_numbers = #tpu.dot_dimension_numbers<[1], [0], [0], [1], [0, 0, 1, 1], [], []>} : vector<16x8xbf16>, vector<8x128xbf16>, vector<16x128xf32> -> vector<16x128xf32>
    %58 = arith.addf %57, %4 : vector<16x128xf32>
    %cst_34 = arith.constant 0.000000e+00 : f32
    %59 = vector.broadcast %cst_34 : f32 to vector<16x128xf32>
    %60 = arith.maximumf %58, %59 : vector<16x128xf32>
    %61 = arith.truncf %60 : vector<16x128xf32> to vector<16x128xbf16>
    %cst_35 = arith.constant dense<0.000000e+00> : vector<32x128xf32>
    %62 = tpu.matmul %1, %61, %cst_35 {dimension_numbers = #tpu.dot_dimension_numbers<[1], [0], [0], [1], [0, 0, 1, 1], [], []>} : vector<32x16xbf16>, vector<16x128xbf16>, vector<32x128xf32> -> vector<32x128xf32>
    %63 = arith.addf %62, %7 : vector<32x128xf32>
    %cst_36 = arith.constant 0.000000e+00 : f32
    %64 = vector.broadcast %cst_36 : f32 to vector<32x128xf32>
    %65 = arith.maximumf %63, %64 : vector<32x128xf32>
    %66 = arith.maximumf %54, %65 : vector<32x128xf32>
    %c5 = arith.constant 5 : index
    %c0_37 = arith.constant 0 : index
    %c0_38 = arith.constant 0 : index
    %67 = vector.load %arg1[%c5, %c0_37, %c0_38] : memref<8x8x128xbf16, #tpu.memory_space<vmem>>, vector<1x8x128xbf16>
    %68 = vector.shape_cast %67 : vector<1x8x128xbf16> to vector<8x128xbf16>
    %cst_39 = arith.constant dense<0.000000e+00> : vector<16x128xf32>
    %69 = tpu.matmul %0, %68, %cst_39 {dimension_numbers = #tpu.dot_dimension_numbers<[1], [0], [0], [1], [0, 0, 1, 1], [], []>} : vector<16x8xbf16>, vector<8x128xbf16>, vector<16x128xf32> -> vector<16x128xf32>
    %70 = arith.addf %69, %4 : vector<16x128xf32>
    %cst_40 = arith.constant 0.000000e+00 : f32
    %71 = vector.broadcast %cst_40 : f32 to vector<16x128xf32>
    %72 = arith.maximumf %70, %71 : vector<16x128xf32>
    %73 = arith.truncf %72 : vector<16x128xf32> to vector<16x128xbf16>
    %cst_41 = arith.constant dense<0.000000e+00> : vector<32x128xf32>
    %74 = tpu.matmul %1, %73, %cst_41 {dimension_numbers = #tpu.dot_dimension_numbers<[1], [0], [0], [1], [0, 0, 1, 1], [], []>} : vector<32x16xbf16>, vector<16x128xbf16>, vector<32x128xf32> -> vector<32x128xf32>
    %75 = arith.addf %74, %7 : vector<32x128xf32>
    %cst_42 = arith.constant 0.000000e+00 : f32
    %76 = vector.broadcast %cst_42 : f32 to vector<32x128xf32>
    %77 = arith.maximumf %75, %76 : vector<32x128xf32>
    %78 = arith.maximumf %66, %77 : vector<32x128xf32>
    %c6 = arith.constant 6 : index
    %c0_43 = arith.constant 0 : index
    %c0_44 = arith.constant 0 : index
    %79 = vector.load %arg1[%c6, %c0_43, %c0_44] : memref<8x8x128xbf16, #tpu.memory_space<vmem>>, vector<1x8x128xbf16>
    %80 = vector.shape_cast %79 : vector<1x8x128xbf16> to vector<8x128xbf16>
    %cst_45 = arith.constant dense<0.000000e+00> : vector<16x128xf32>
    %81 = tpu.matmul %0, %80, %cst_45 {dimension_numbers = #tpu.dot_dimension_numbers<[1], [0], [0], [1], [0, 0, 1, 1], [], []>} : vector<16x8xbf16>, vector<8x128xbf16>, vector<16x128xf32> -> vector<16x128xf32>
    %82 = arith.addf %81, %4 : vector<16x128xf32>
    %cst_46 = arith.constant 0.000000e+00 : f32
    %83 = vector.broadcast %cst_46 : f32 to vector<16x128xf32>
    %84 = arith.maximumf %82, %83 : vector<16x128xf32>
    %85 = arith.truncf %84 : vector<16x128xf32> to vector<16x128xbf16>
    %cst_47 = arith.constant dense<0.000000e+00> : vector<32x128xf32>
    %86 = tpu.matmul %1, %85, %cst_47 {dimension_numbers = #tpu.dot_dimension_numbers<[1], [0], [0], [1], [0, 0, 1, 1], [], []>} : vector<32x16xbf16>, vector<16x128xbf16>, vector<32x128xf32> -> vector<32x128xf32>
    %87 = arith.addf %86, %7 : vector<32x128xf32>
    %cst_48 = arith.constant 0.000000e+00 : f32
    %88 = vector.broadcast %cst_48 : f32 to vector<32x128xf32>
    %89 = arith.maximumf %87, %88 : vector<32x128xf32>
    %90 = arith.maximumf %78, %89 : vector<32x128xf32>
    %c7 = arith.constant 7 : index
    %c0_49 = arith.constant 0 : index
    %c0_50 = arith.constant 0 : index
    %91 = vector.load %arg1[%c7, %c0_49, %c0_50] : memref<8x8x128xbf16, #tpu.memory_space<vmem>>, vector<1x8x128xbf16>
    %92 = vector.shape_cast %91 : vector<1x8x128xbf16> to vector<8x128xbf16>
    %cst_51 = arith.constant dense<0.000000e+00> : vector<16x128xf32>
    %93 = tpu.matmul %0, %92, %cst_51 {dimension_numbers = #tpu.dot_dimension_numbers<[1], [0], [0], [1], [0, 0, 1, 1], [], []>} : vector<16x8xbf16>, vector<8x128xbf16>, vector<16x128xf32> -> vector<16x128xf32>
    %94 = arith.addf %93, %4 : vector<16x128xf32>
    %cst_52 = arith.constant 0.000000e+00 : f32
    %95 = vector.broadcast %cst_52 : f32 to vector<16x128xf32>
    %96 = arith.maximumf %94, %95 : vector<16x128xf32>
    %97 = arith.truncf %96 : vector<16x128xf32> to vector<16x128xbf16>
    %cst_53 = arith.constant dense<0.000000e+00> : vector<32x128xf32>
    %98 = tpu.matmul %1, %97, %cst_53 {dimension_numbers = #tpu.dot_dimension_numbers<[1], [0], [0], [1], [0, 0, 1, 1], [], []>} : vector<32x16xbf16>, vector<16x128xbf16>, vector<32x128xf32> -> vector<32x128xf32>
    %99 = arith.addf %98, %7 : vector<32x128xf32>
    %cst_54 = arith.constant 0.000000e+00 : f32
    %100 = vector.broadcast %cst_54 : f32 to vector<32x128xf32>
    %101 = arith.maximumf %99, %100 : vector<32x128xf32>
    %102 = arith.maximumf %90, %101 : vector<32x128xf32>
    %103 = arith.truncf %102 : vector<32x128xf32> to vector<32x128xbf16>
    %c0_55 = arith.constant 0 : index
    %c0_56 = arith.constant 0 : index
    %104 = vector.load %arg6[%c0_55, %c0_56] : memref<32x128xbf16, #tpu.memory_space<vmem>>, vector<32x128xbf16>
    tpu.vector_store %arg6[%c0_55, %c0_56], %103 {strides = array<i32>} : memref<32x128xbf16, #tpu.memory_space<vmem>>, vector<32x128xbf16>,
    return
  }
  func.func @transform_0(%arg0: i32) -> (i32, i32, i32) {
    %c0_i32 = arith.constant 0 : i32
    %c0_i32_0 = arith.constant 0 : i32
    %c0_i32_1 = arith.constant 0 : i32
    return %c0_i32, %c0_i32_0, %arg0 : i32, i32, i32
  }
  func.func @transform_1(%arg0: i32) -> (i32, i32) {
    %c0_i32 = arith.constant 0 : i32
    %c0_i32_0 = arith.constant 0 : i32
    %c0_i32_1 = arith.constant 0 : i32
    return %c0_i32, %c0_i32_0 : i32, i32
  }
  func.func @transform_2(%arg0: i32) -> (i32, i32) {
    %c0_i32 = arith.constant 0 : i32
    %c0_i32_0 = arith.constant 0 : i32
    %c0_i32_1 = arith.constant 0 : i32
    return %c0_i32, %c0_i32_0 : i32, i32
  }
  func.func @transform_3(%arg0: i32) -> (i32, i32) {
    %c0_i32 = arith.constant 0 : i32
    %c0_i32_0 = arith.constant 0 : i32
    %c0_i32_1 = arith.constant 0 : i32
    return %c0_i32, %c0_i32_0 : i32, i32
  }
  func.func @transform_4(%arg0: i32) -> (i32, i32) {
    %c0_i32 = arith.constant 0 : i32
    %c0_i32_0 = arith.constant 0 : i32
    %c0_i32_1 = arith.constant 0 : i32
    return %c0_i32, %c0_i32_0 : i32, i32
  }
  func.func @transform_5(%arg0: i32) -> (i32, i32) {
    %c0_i32 = arith.constant 0 : i32
    %c0_i32_0 = arith.constant 0 : i32
    return %c0_i32, %arg0 : i32, i32
  }
}

</mosaic_0001>

<llo_original>
// kernel: tpu_custom_call.1
$region0: #{tpu_custom_call.1}
  #allocation0 [shape = 'u32[]', space=smem, size = 0x4, offset = 0x4, fixed_abs, tag = 'smem constant byte address 0x4 - core index']
  #allocation1 [shape = 'u32[144,128]{1,0:T(1,128)}', space=vmem, size = 0x12000, scoped, tag = 'internal scratch']
  %s0 = inlined_call_operand.vmem [shape: bf16[8,8,128], index: 0, kind: input, shape index: {}]
  %s1 = inlined_call_operand.vmem [shape: bf16[16,8], index: 1, kind: input, shape index: {}]
  %s2 = inlined_call_operand.vmem [shape: f32[16,1], index: 2, kind: input, shape index: {}]
  %s3 = inlined_call_operand.vmem [shape: bf16[32,16], index: 3, kind: input, shape index: {}]
  %s4 = inlined_call_operand.vmem [shape: f32[32,1], index: 4, kind: input, shape index: {}]
  %s5 = inlined_call_operand.hbm [shape: bf16[32,128], index: 5, kind: output, shape index: {}]
  %s6 = sld [smem:[#allocation0]]
  $region30: #{tpu_custom_call.1} parent=0
    _
  %s8 = ssub.s32 1, %s6
  %s9 = scalar_select 0, %s8, %s6
  $region1: #{tpu_custom_call.1} parent=0
    #allocation2 [shape = 'u8[8192]{0}', space=vmem, size = 0x2000, scoped, tag = 'output window, operand 0, single buffered']
    #allocation3 [shape = 's32[1]{0}', space=sflag, size = 0x4, scoped, tag = 'scoped memory for tpu_custom_call.1']
    %10 = vsyncpa [#allocation3], 0
    // Predicated region
    $region2: #{tpu_custom_call.1} parent=1 // pred_check
      _
    $region3: #{tpu_custom_call.1} parent=1 // pred_check_branch
      %12 = sbr.rel (0) target = $region5
    $region4: #{tpu_custom_call.1} parent=1 // pred_region
      _
    $region5: #{tpu_custom_call.1} parent=1 // pred_fallthru
      _
    // Predicated region
    $region6: #{tpu_custom_call.1} parent=1 // pred_check
      _
    $region7: #{tpu_custom_call.1} parent=1 // pred_check_branch
      %14 = sbr.rel (0) target = $region9
    $region8: #{tpu_custom_call.1} parent=1 // pred_region
      _
    $region9: #{tpu_custom_call.1} parent=1 // pred_fallthru
      _
    // Predicated region
    $region10: #{tpu_custom_call.1} parent=1 // pred_check
      _
    $region11: #{tpu_custom_call.1} parent=1 // pred_check_branch
      %16 = sbr.rel (0) target = $region13
    $region12: #{tpu_custom_call.1} parent=1 // pred_region
      _
    $region13: #{tpu_custom_call.1} parent=1 // pred_fallthru
      _
    // Predicated region
    $region14: #{tpu_custom_call.1} parent=1 // pred_check
      _
    $region15: #{tpu_custom_call.1} parent=1 // pred_check_branch
      %18 = sbr.rel (0) target = $region17
    $region16: #{tpu_custom_call.1} parent=1 // pred_region
      _
    $region17: #{tpu_custom_call.1} parent=1 // pred_fallthru
      _
    // Predicated region
    $region18: #{tpu_custom_call.1} parent=1 // pred_check
      _
    $region19: #{tpu_custom_call.1} parent=1 // pred_check_branch
      %20 = sbr.rel (0) target = $region21
    $region20: #{tpu_custom_call.1} parent=1 // pred_region
      _
    $region21: #{tpu_custom_call.1} parent=1 // pred_fallthru
      _
    %v22 = vld [vmem:[%s1] sm:$0xf]
    %v23 = vld [vmem:[%s1 + $0x4] sm:$0xf]
    %v24 = vld [vmem:[%s3] sm:$0xf]
    %v25 = vld [vmem:[%s3 + $0x4] sm:$0xf]
    %v26 = vld [vmem:[%s3 + $0x8] sm:$0xf]
    %v27 = vld [vmem:[%s3 + $0xc] sm:$0xf]
    %v28 = vld [vmem:[%s2] sm:$0xff]
    %v29 = vld [vmem:[%s2 + $0x8] sm:$0xff]
    %31 = vset.pattern.permute.xlu0 0
    %32 = vperm.xlu0 %31, %v28
    %v33 = vpop.permute.xlu0 %32
    %36 = vset.pattern.permute.xlu0 0
    %37 = vperm.xlu0 %36, %v29
    %v38 = vpop.permute.xlu0 %37
    %v40 = vld [vmem:[%s4] sm:$0xff]
    %v41 = vld [vmem:[%s4 + $0x8] sm:$0xff]
    %v42 = vld [vmem:[%s4 + $0x10] sm:$0xff]
    %v43 = vld [vmem:[%s4 + $0x18] sm:$0xff]
    %45 = vset.pattern.permute.xlu0 0
    %46 = vperm.xlu0 %45, %v40
    %v47 = vpop.permute.xlu0 %46
    %50 = vset.pattern.permute.xlu0 0
    %51 = vperm.xlu0 %50, %v41
    %v52 = vpop.permute.xlu0 %51
    %55 = vset.pattern.permute.xlu0 0
    %56 = vperm.xlu0 %55, %v42
    %v57 = vpop.permute.xlu0 %56
    %60 = vset.pattern.permute.xlu0 0
    %61 = vperm.xlu0 %60, %v43
    %v62 = vpop.permute.xlu0 %61
    %v64 = vld [vmem:[%s0] sm:$0xf]
    %v67 = vunpack.c.l.b16 %v22
    %v68 = vunpack.c.l.b16 %v23
    %v69 = vpack.c.b16 %v68, %v67
    %vm70 = vcmask 64512
    %v72 = vsel %vm70, %v69, 0
    %vm74 = vcmask 1043456
    %v76 = vsel %vm74, %v64, 0
    %78 = vmatprep.subr.bf16.mxu0 0
    %79 = vmatpush1.bf16.msra.mxu0 %v76
    %80 = vmatprep.subr.bf16.mxu0 0
    %81 = vmatpush1.bf16.msra.mxu0 0
    %82 = vmatprep.subr.bf16.mxu0 0
    %83 = vmatpush1.bf16.msra.mxu0 0
    %84 = vmatprep.subr.bf16.mxu0 0
    %85 = vmatpush1.bf16.msra.mxu0 0
    %86 = vmatprep.subr.bf16.mxu0 0
    %87 = vmatpush1.bf16.msra.mxu0 0
    %88 = vmatprep.subr.bf16.mxu0 0
    %89 = vmatpush1.bf16.msra.mxu0 0
    %90 = vmatprep.subr.bf16.mxu0 0
    %91 = vmatpush1.bf16.msra.mxu0 0
    %92 = vmatprep.subr.bf16.mxu0 0
    %93 = vmatpush1.bf16.msra.mxu0 0
    %94 = vmatprep.subr.bf16.mxu0 0
    %95 = vmatpush1.bf16.msra.mxu0 0
    %96 = vmatprep.subr.bf16.mxu0 0
    %97 = vmatpush1.bf16.msra.mxu0 0
    %98 = vmatprep.subr.bf16.mxu0 0
    %99 = vmatpush1.bf16.msra.mxu0 0
    %100 = vmatprep.subr.bf16.mxu0 0
    %101 = vmatpush1.bf16.msra.mxu0 0
    %102 = vmatprep.subr.bf16.mxu0 0
    %103 = vmatpush1.bf16.msra.mxu0 0
    %104 = vmatprep.subr.bf16.mxu0 0
    %105 = vmatpush1.bf16.msra.mxu0 0
    %106 = vmatprep.subr.bf16.mxu0 0
    %107 = vmatpush1.bf16.msra.mxu0 0
    %108 = vmatprep.subr.bf16.mxu0 0
    %109 = vmatpush1.bf16.msra.mxu0 0
    %110 = vmatprep.mubr.bf16.mxu0 0
    %111 = vmatmul.mubr.bf16.gmra.mrb[0].mxu0 %v72
    %v112 = vpop.f32.mrb[0].mxu0
    %v113 = vadd.f32 %v33, %v112
    %v114 = vpop.f32.mrb[0].mxu0
    %v115 = vpop.f32.mrb[0].mxu0
    %v116 = vadd.f32 %v38, %v115
    %v117 = vpop.f32.mrb[0].mxu0
    %118 = vdwg.mxu0
    %v119 = vmax.f32 %v113, 0.0
    %v120 = vmax.f32 %v116, 0.0
    %v121 = vpack.c.bf16 %v120, %v119
    %v126 = vunpack.c.l.b16 %v24
    %v127 = vunpack.c.l.b16 %v25
    %v128 = vunpack.c.l.b16 %v26
    %v129 = vunpack.c.l.b16 %v27
    %v130 = vpack.c.b16 %v127, %v126
    %v131 = vpack.c.b16 %v129, %v128
    %vm132 = vcmask 130048
    %v134 = vsel %vm132, %v130, 0
    %v137 = vsel %vm132, %v131, 0
    %139 = vmatprep.subr.bf16.mxu0 0
    %140 = vmatpush1.bf16.msra.mxu0 %v121
    %141 = vmatprep.subr.bf16.mxu0 0
    %142 = vmatpush1.bf16.msra.mxu0 0
    %143 = vmatprep.subr.bf16.mxu0 0
    %144 = vmatpush1.bf16.msra.mxu0 0
    %145 = vmatprep.subr.bf16.mxu0 0
    %146 = vmatpush1.bf16.msra.mxu0 0
    %147 = vmatprep.subr.bf16.mxu0 0
    %148 = vmatpush1.bf16.msra.mxu0 0
    %149 = vmatprep.subr.bf16.mxu0 0
    %150 = vmatpush1.bf16.msra.mxu0 0
    %151 = vmatprep.subr.bf16.mxu0 0
    %152 = vmatpush1.bf16.msra.mxu0 0
    %153 = vmatprep.subr.bf16.mxu0 0
    %154 = vmatpush1.bf16.msra.mxu0 0
    %155 = vmatprep.subr.bf16.mxu0 0
    %156 = vmatpush1.bf16.msra.mxu0 0
    %157 = vmatprep.subr.bf16.mxu0 0
    %158 = vmatpush1.bf16.msra.mxu0 0
    %159 = vmatprep.subr.bf16.mxu0 0
    %160 = vmatpush1.bf16.msra.mxu0 0
    %161 = vmatprep.subr.bf16.mxu0 0
    %162 = vmatpush1.bf16.msra.mxu0 0
    %163 = vmatprep.subr.bf16.mxu0 0
    %164 = vmatpush1.bf16.msra.mxu0 0
    %165 = vmatprep.subr.bf16.mxu0 0
    %166 = vmatpush1.bf16.msra.mxu0 0
    %167 = vmatprep.subr.bf16.mxu0 0
    %168 = vmatpush1.bf16.msra.mxu0 0
    %169 = vmatprep.subr.bf16.mxu0 0
    %170 = vmatpush1.bf16.msra.mxu0 0
    %171 = vmatprep.mubr.bf16.mxu0 0
    %172 = vmatmul.mubr.bf16.gmra.mrb[0].mxu0 %v134
    %v173 = vpop.f32.mrb[0].mxu0
    %v174 = vadd.f32 %v47, %v173
    %v175 = vpop.f32.mrb[0].mxu0
    %v176 = vpop.f32.mrb[0].mxu0
    %v177 = vadd.f32 %v52, %v176
    %v178 = vpop.f32.mrb[0].mxu0
    %179 = vmatprep.mubr.bf16.mxu0 0
    %180 = vmatmul.mubr.bf16.gmra.mrb[0].mxu0 %v137
    %v181 = vpop.f32.mrb[0].mxu0
    %v182 = vadd.f32 %v57, %v181
    %v183 = vpop.f32.mrb[0].mxu0
    %v184 = vpop.f32.mrb[0].mxu0
    %v185 = vadd.f32 %v62, %v184
    %v186 = vpop.f32.mrb[0].mxu0
    %187 = vdwg.mxu0
    %v188 = vmax.f32 %v174, 0.0
    %v189 = vmax.f32 %v177, 0.0
    %v190 = vmax.f32 %v182, 0.0
    %v191 = vmax.f32 %v185, 0.0
    %s192 = scalar_lea.vmem %s0, 4
    %v193 = vld [vmem:[%s192] sm:$0xf]
    %v195 = vsel %vm74, %v193, 0
    %197 = vmatprep.subr.bf16.mxu0 0
    %198 = vmatpush1.bf16.msra.mxu0 %v195
    %199 = vmatprep.subr.bf16.mxu0 0
    %200 = vmatpush1.bf16.msra.mxu0 0
    %201 = vmatprep.subr.bf16.mxu0 0
    %202 = vmatpush1.bf16.msra.mxu0 0
    %203 = vmatprep.subr.bf16.mxu0 0
    %204 = vmatpush1.bf16.msra.mxu0 0
    %205 = vmatprep.subr.bf16.mxu0 0
    %206 = vmatpush1.bf16.msra.mxu0 0
    %207 = vmatprep.subr.bf16.mxu0 0
    %208 = vmatpush1.bf16.msra.mxu0 0
    %209 = vmatprep.subr.bf16.mxu0 0
    %210 = vmatpush1.bf16.msra.mxu0 0
    %211 = vmatprep.subr.bf16.mxu0 0
    %212 = vmatpush1.bf16.msra.mxu0 0
    %213 = vmatprep.subr.bf16.mxu0 0
    %214 = vmatpush1.bf16.msra.mxu0 0
    %215 = vmatprep.subr.bf16.mxu0 0
    %216 = vmatpush1.bf16.msra.mxu0 0
    %217 = vmatprep.subr.bf16.mxu0 0
    %218 = vmatpush1.bf16.msra.mxu0 0
    %219 = vmatprep.subr.bf16.mxu0 0
    %220 = vmatpush1.bf16.msra.mxu0 0
    %221 = vmatprep.subr.bf16.mxu0 0
    %222 = vmatpush1.bf16.msra.mxu0 0
    %223 = vmatprep.subr.bf16.mxu0 0
    %224 = vmatpush1.bf16.msra.mxu0 0
    %225 = vmatprep.subr.bf16.mxu0 0
    %226 = vmatpush1.bf16.msra.mxu0 0
    %227 = vmatprep.subr.bf16.mxu0 0
    %228 = vmatpush1.bf16.msra.mxu0 0
    %229 = vmatprep.mubr.bf16.mxu0 0
    %230 = vmatmul.mubr.bf16.gmra.mrb[0].mxu0 %v72
    %v231 = vpop.f32.mrb[0].mxu0
    %v232 = vadd.f32 %v33, %v231
    %v233 = vpop.f32.mrb[0].mxu0
    %v234 = vpop.f32.mrb[0].mxu0
    %v235 = vadd.f32 %v38, %v234
    %v236 = vpop.f32.mrb[0].mxu0
    %237 = vdwg.mxu0
    %v238 = vmax.f32 %v232, 0.0
    %v239 = vmax.f32 %v235, 0.0
    %v240 = vpack.c.bf16 %v239, %v238
    %241 = vmatprep.subr.bf16.mxu0 0
    %242 = vmatpush1.bf16.msra.mxu0 %v240
    %243 = vmatprep.subr.bf16.mxu0 0
    %244 = vmatpush1.bf16.msra.mxu0 0
    %245 = vmatprep.subr.bf16.mxu0 0
    %246 = vmatpush1.bf16.msra.mxu0 0
    %247 = vmatprep.subr.bf16.mxu0 0
    %248 = vmatpush1.bf16.msra.mxu0 0
    %249 = vmatprep.subr.bf16.mxu0 0
    %250 = vmatpush1.bf16.msra.mxu0 0
    %251 = vmatprep.subr.bf16.mxu0 0
    %252 = vmatpush1.bf16.msra.mxu0 0
    %253 = vmatprep.subr.bf16.mxu0 0
    %254 = vmatpush1.bf16.msra.mxu0 0
    %255 = vmatprep.subr.bf16.mxu0 0
    %256 = vmatpush1.bf16.msra.mxu0 0
    %257 = vmatprep.subr.bf16.mxu0 0
    %258 = vmatpush1.bf16.msra.mxu0 0
    %259 = vmatprep.subr.bf16.mxu0 0
    %260 = vmatpush1.bf16.msra.mxu0 0
    %261 = vmatprep.subr.bf16.mxu0 0
    %262 = vmatpush1.bf16.msra.mxu0 0
    %263 = vmatprep.subr.bf16.mxu0 0
    %264 = vmatpush1.bf16.msra.mxu0 0
    %265 = vmatprep.subr.bf16.mxu0 0
    %266 = vmatpush1.bf16.msra.mxu0 0
    %267 = vmatprep.subr.bf16.mxu0 0
    %268 = vmatpush1.bf16.msra.mxu0 0
    %269 = vmatprep.subr.bf16.mxu0 0
    %270 = vmatpush1.bf16.msra.mxu0 0
    %271 = vmatprep.subr.bf16.mxu0 0
    %272 = vmatpush1.bf16.msra.mxu0 0
    %273 = vmatprep.mubr.bf16.mxu0 0
    %274 = vmatmul.mubr.bf16.gmra.mrb[0].mxu0 %v134
    %v275 = vpop.f32.mrb[0].mxu0
    %v276 = vadd.f32 %v47, %v275
    %v277 = vpop.f32.mrb[0].mxu0
    %v278 = vpop.f32.mrb[0].mxu0
    %v279 = vadd.f32 %v52, %v278
    %v280 = vpop.f32.mrb[0].mxu0
    %281 = vmatprep.mubr.bf16.mxu0 0
    %282 = vmatmul.mubr.bf16.gmra.mrb[0].mxu0 %v137
    %v283 = vpop.f32.mrb[0].mxu0
    %v284 = vadd.f32 %v57, %v283
    %v285 = vpop.f32.mrb[0].mxu0
    %v286 = vpop.f32.mrb[0].mxu0
    %v287 = vadd.f32 %v62, %v286
    %v288 = vpop.f32.mrb[0].mxu0
    %289 = vdwg.mxu0
    %v290 = vmax.f32 %v276, 0.0
    %v291 = vmax.f32 %v279, 0.0
    %v292 = vmax.f32 %v284, 0.0
    %v293 = vmax.f32 %v287, 0.0
    %v294 = vmax.f32 %v188, %v290
    %v295 = vmax.f32 %v189, %v291
    %v296 = vmax.f32 %v190, %v292
    %v297 = vmax.f32 %v191, %v293
    %s298 = scalar_lea.vmem %s0, 8
    %v299 = vld [vmem:[%s298] sm:$0xf]
    %v301 = vsel %vm74, %v299, 0
    %303 = vmatprep.subr.bf16.mxu0 0
    %304 = vmatpush1.bf16.msra.mxu0 %v301
    %305 = vmatprep.subr.bf16.mxu0 0
    %306 = vmatpush1.bf16.msra.mxu0 0
    %307 = vmatprep.subr.bf16.mxu0 0
    %308 = vmatpush1.bf16.msra.mxu0 0
    %309 = vmatprep.subr.bf16.mxu0 0
    %310 = vmatpush1.bf16.msra.mxu0 0
    %311 = vmatprep.subr.bf16.mxu0 0
    %312 = vmatpush1.bf16.msra.mxu0 0
    %313 = vmatprep.subr.bf16.mxu0 0
    %314 = vmatpush1.bf16.msra.mxu0 0
    %315 = vmatprep.subr.bf16.mxu0 0
    %316 = vmatpush1.bf16.msra.mxu0 0
    %317 = vmatprep.subr.bf16.mxu0 0
    %318 = vmatpush1.bf16.msra.mxu0 0
    %319 = vmatprep.subr.bf16.mxu0 0
    %320 = vmatpush1.bf16.msra.mxu0 0
    %321 = vmatprep.subr.bf16.mxu0 0
    %322 = vmatpush1.bf16.msra.mxu0 0
    %323 = vmatprep.subr.bf16.mxu0 0
    %324 = vmatpush1.bf16.msra.mxu0 0
    %325 = vmatprep.subr.bf16.mxu0 0
    %326 = vmatpush1.bf16.msra.mxu0 0
    %327 = vmatprep.subr.bf16.mxu0 0
    %328 = vmatpush1.bf16.msra.mxu0 0
    %329 = vmatprep.subr.bf16.mxu0 0
    %330 = vmatpush1.bf16.msra.mxu0 0
    %331 = vmatprep.subr.bf16.mxu0 0
    %332 = vmatpush1.bf16.msra.mxu0 0
    %333 = vmatprep.subr.bf16.mxu0 0
    %334 = vmatpush1.bf16.msra.mxu0 0
    %335 = vmatprep.mubr.bf16.mxu0 0
    %336 = vmatmul.mubr.bf16.gmra.mrb[0].mxu0 %v72
    %v337 = vpop.f32.mrb[0].mxu0
    %v338 = vadd.f32 %v33, %v337
    %v339 = vpop.f32.mrb[0].mxu0
    %v340 = vpop.f32.mrb[0].mxu0
    %v341 = vadd.f32 %v38, %v340
    %v342 = vpop.f32.mrb[0].mxu0
    %343 = vdwg.mxu0
    %v344 = vmax.f32 %v338, 0.0
    %v345 = vmax.f32 %v341, 0.0
    %v346 = vpack.c.bf16 %v345, %v344
    %347 = vmatprep.subr.bf16.mxu0 0
    %348 = vmatpush1.bf16.msra.mxu0 %v346
    %349 = vmatprep.subr.bf16.mxu0 0
    %350 = vmatpush1.bf16.msra.mxu0 0
    %351 = vmatprep.subr.bf16.mxu0 0
    %352 = vmatpush1.bf16.msra.mxu0 0
    %353 = vmatprep.subr.bf16.mxu0 0
    %354 = vmatpush1.bf16.msra.mxu0 0
    %355 = vmatprep.subr.bf16.mxu0 0
    %356 = vmatpush1.bf16.msra.mxu0 0
    %357 = vmatprep.subr.bf16.mxu0 0
    %358 = vmatpush1.bf16.msra.mxu0 0
    %359 = vmatprep.subr.bf16.mxu0 0
    %360 = vmatpush1.bf16.msra.mxu0 0
    %361 = vmatprep.subr.bf16.mxu0 0
    %362 = vmatpush1.bf16.msra.mxu0 0
    %363 = vmatprep.subr.bf16.mxu0 0
    %364 = vmatpush1.bf16.msra.mxu0 0
    %365 = vmatprep.subr.bf16.mxu0 0
    %366 = vmatpush1.bf16.msra.mxu0 0
    %367 = vmatprep.subr.bf16.mxu0 0
    %368 = vmatpush1.bf16.msra.mxu0 0
    %369 = vmatprep.subr.bf16.mxu0 0
    %370 = vmatpush1.bf16.msra.mxu0 0
    %371 = vmatprep.subr.bf16.mxu0 0
    %372 = vmatpush1.bf16.msra.mxu0 0
    %373 = vmatprep.subr.bf16.mxu0 0
    %374 = vmatpush1.bf16.msra.mxu0 0
    %375 = vmatprep.subr.bf16.mxu0 0
    %376 = vmatpush1.bf16.msra.mxu0 0
    %377 = vmatprep.subr.bf16.mxu0 0
    %378 = vmatpush1.bf16.msra.mxu0 0
    %379 = vmatprep.mubr.bf16.mxu0 0
    %380 = vmatmul.mubr.bf16.gmra.mrb[0].mxu0 %v134
    %v381 = vpop.f32.mrb[0].mxu0
    %v382 = vadd.f32 %v47, %v381
    %v383 = vpop.f32.mrb[0].mxu0
    %v384 = vpop.f32.mrb[0].mxu0
    %v385 = vadd.f32 %v52, %v384
    %v386 = vpop.f32.mrb[0].mxu0
    %387 = vmatprep.mubr.bf16.mxu0 0
    %388 = vmatmul.mubr.bf16.gmra.mrb[0].mxu0 %v137
    %v389 = vpop.f32.mrb[0].mxu0
    %v390 = vadd.f32 %v57, %v389
    %v391 = vpop.f32.mrb[0].mxu0
    %v392 = vpop.f32.mrb[0].mxu0
    %v393 = vadd.f32 %v62, %v392
    %v394 = vpop.f32.mrb[0].mxu0
    %395 = vdwg.mxu0
    %v396 = vmax.f32 %v382, 0.0
    %v397 = vmax.f32 %v385, 0.0
    %v398 = vmax.f32 %v390, 0.0
    %v399 = vmax.f32 %v393, 0.0
    %v400 = vmax.f32 %v294, %v396
    %v401 = vmax.f32 %v295, %v397
    %v402 = vmax.f32 %v296, %v398
    %v403 = vmax.f32 %v297, %v399
    %s404 = scalar_lea.vmem %s0, 12
    %v405 = vld [vmem:[%s404] sm:$0xf]
    %v407 = vsel %vm74, %v405, 0
    %409 = vmatprep.subr.bf16.mxu0 0
    %410 = vmatpush1.bf16.msra.mxu0 %v407
    %411 = vmatprep.subr.bf16.mxu0 0
    %412 = vmatpush1.bf16.msra.mxu0 0
    %413 = vmatprep.subr.bf16.mxu0 0
    %414 = vmatpush1.bf16.msra.mxu0 0
    %415 = vmatprep.subr.bf16.mxu0 0
    %416 = vmatpush1.bf16.msra.mxu0 0
    %417 = vmatprep.subr.bf16.mxu0 0
    %418 = vmatpush1.bf16.msra.mxu0 0
    %419 = vmatprep.subr.bf16.mxu0 0
    %420 = vmatpush1.bf16.msra.mxu0 0
    %421 = vmatprep.subr.bf16.mxu0 0
    %422 = vmatpush1.bf16.msra.mxu0 0
    %423 = vmatprep.subr.bf16.mxu0 0
    %424 = vmatpush1.bf16.msra.mxu0 0
    %425 = vmatprep.subr.bf16.mxu0 0
    %426 = vmatpush1.bf16.msra.mxu0 0
    %427 = vmatprep.subr.bf16.mxu0 0
    %428 = vmatpush1.bf16.msra.mxu0 0
    %429 = vmatprep.subr.bf16.mxu0 0
    %430 = vmatpush1.bf16.msra.mxu0 0
    %431 = vmatprep.subr.bf16.mxu0 0
    %432 = vmatpush1.bf16.msra.mxu0 0
    %433 = vmatprep.subr.bf16.mxu0 0
    %434 = vmatpush1.bf16.msra.mxu0 0
    %435 = vmatprep.subr.bf16.mxu0 0
    %436 = vmatpush1.bf16.msra.mxu0 0
    %437 = vmatprep.subr.bf16.mxu0 0
    %438 = vmatpush1.bf16.msra.mxu0 0
    %439 = vmatprep.subr.bf16.mxu0 0
    %440 = vmatpush1.bf16.msra.mxu0 0
    %441 = vmatprep.mubr.bf16.mxu0 0
    %442 = vmatmul.mubr.bf16.gmra.mrb[0].mxu0 %v72
    %v443 = vpop.f32.mrb[0].mxu0
    %v444 = vadd.f32 %v33, %v443
    %v445 = vpop.f32.mrb[0].mxu0
    %v446 = vpop.f32.mrb[0].mxu0
    %v447 = vadd.f32 %v38, %v446
    %v448 = vpop.f32.mrb[0].mxu0
    %449 = vdwg.mxu0
    %v450 = vmax.f32 %v444, 0.0
    %v451 = vmax.f32 %v447, 0.0
    %v452 = vpack.c.bf16 %v451, %v450
    %453 = vmatprep.subr.bf16.mxu0 0
    %454 = vmatpush1.bf16.msra.mxu0 %v452
    %455 = vmatprep.subr.bf16.mxu0 0
    %456 = vmatpush1.bf16.msra.mxu0 0
    %457 = vmatprep.subr.bf16.mxu0 0
    %458 = vmatpush1.bf16.msra.mxu0 0
    %459 = vmatprep.subr.bf16.mxu0 0
    %460 = vmatpush1.bf16.msra.mxu0 0
    %461 = vmatprep.subr.bf16.mxu0 0
    %462 = vmatpush1.bf16.msra.mxu0 0
    %463 = vmatprep.subr.bf16.mxu0 0
    %464 = vmatpush1.bf16.msra.mxu0 0
    %465 = vmatprep.subr.bf16.mxu0 0
    %466 = vmatpush1.bf16.msra.mxu0 0
    %467 = vmatprep.subr.bf16.mxu0 0
    %468 = vmatpush1.bf16.msra.mxu0 0
    %469 = vmatprep.subr.bf16.mxu0 0
    %470 = vmatpush1.bf16.msra.mxu0 0
    %471 = vmatprep.subr.bf16.mxu0 0
    %472 = vmatpush1.bf16.msra.mxu0 0
    %473 = vmatprep.subr.bf16.mxu0 0
    %474 = vmatpush1.bf16.msra.mxu0 0
    %475 = vmatprep.subr.bf16.mxu0 0
    %476 = vmatpush1.bf16.msra.mxu0 0
    %477 = vmatprep.subr.bf16.mxu0 0
    %478 = vmatpush1.bf16.msra.mxu0 0
    %479 = vmatprep.subr.bf16.mxu0 0
    %480 = vmatpush1.bf16.msra.mxu0 0
    %481 = vmatprep.subr.bf16.mxu0 0
    %482 = vmatpush1.bf16.msra.mxu0 0
    %483 = vmatprep.subr.bf16.mxu0 0
    %484 = vmatpush1.bf16.msra.mxu0 0
    %485 = vmatprep.mubr.bf16.mxu0 0
    %486 = vmatmul.mubr.bf16.gmra.mrb[0].mxu0 %v134
    %v487 = vpop.f32.mrb[0].mxu0
    %v488 = vadd.f32 %v47, %v487
    %v489 = vpop.f32.mrb[0].mxu0
    %v490 = vpop.f32.mrb[0].mxu0
    %v491 = vadd.f32 %v52, %v490
    %v492 = vpop.f32.mrb[0].mxu0
    %493 = vmatprep.mubr.bf16.mxu0 0
    %494 = vmatmul.mubr.bf16.gmra.mrb[0].mxu0 %v137
    %v495 = vpop.f32.mrb[0].mxu0
    %v496 = vadd.f32 %v57, %v495
    %v497 = vpop.f32.mrb[0].mxu0
    %v498 = vpop.f32.mrb[0].mxu0
    %v499 = vadd.f32 %v62, %v498
    %v500 = vpop.f32.mrb[0].mxu0
    %501 = vdwg.mxu0
    %v502 = vmax.f32 %v488, 0.0
    %v503 = vmax.f32 %v491, 0.0
    %v504 = vmax.f32 %v496, 0.0
    %v505 = vmax.f32 %v499, 0.0
    %v506 = vmax.f32 %v400, %v502
    %v507 = vmax.f32 %v401, %v503
    %v508 = vmax.f32 %v402, %v504
    %v509 = vmax.f32 %v403, %v505
    %s510 = scalar_lea.vmem %s0, 16
    %v511 = vld [vmem:[%s510] sm:$0xf]
    %v513 = vsel %vm74, %v511, 0
    %515 = vmatprep.subr.bf16.mxu0 0
    %516 = vmatpush1.bf16.msra.mxu0 %v513
    %517 = vmatprep.subr.bf16.mxu0 0
    %518 = vmatpush1.bf16.msra.mxu0 0
    %519 = vmatprep.subr.bf16.mxu0 0
    %520 = vmatpush1.bf16.msra.mxu0 0
    %521 = vmatprep.subr.bf16.mxu0 0
    %522 = vmatpush1.bf16.msra.mxu0 0
    %523 = vmatprep.subr.bf16.mxu0 0
    %524 = vmatpush1.bf16.msra.mxu0 0
    %525 = vmatprep.subr.bf16.mxu0 0
    %526 = vmatpush1.bf16.msra.mxu0 0
    %527 = vmatprep.subr.bf16.mxu0 0
    %528 = vmatpush1.bf16.msra.mxu0 0
    %529 = vmatprep.subr.bf16.mxu0 0
    %530 = vmatpush1.bf16.msra.mxu0 0
    %531 = vmatprep.subr.bf16.mxu0 0
    %532 = vmatpush1.bf16.msra.mxu0 0
    %533 = vmatprep.subr.bf16.mxu0 0
    %534 = vmatpush1.bf16.msra.mxu0 0
    %535 = vmatprep.subr.bf16.mxu0 0
    %536 = vmatpush1.bf16.msra.mxu0 0
    %537 = vmatprep.subr.bf16.mxu0 0
    %538 = vmatpush1.bf16.msra.mxu0 0
    %539 = vmatprep.subr.bf16.mxu0 0
    %540 = vmatpush1.bf16.msra.mxu0 0
    %541 = vmatprep.subr.bf16.mxu0 0
    %542 = vmatpush1.bf16.msra.mxu0 0
    %543 = vmatprep.subr.bf16.mxu0 0
    %544 = vmatpush1.bf16.msra.mxu0 0
    %545 = vmatprep.subr.bf16.mxu0 0
    %546 = vmatpush1.bf16.msra.mxu0 0
    %547 = vmatprep.mubr.bf16.mxu0 0
    %548 = vmatmul.mubr.bf16.gmra.mrb[0].mxu0 %v72
    %v549 = vpop.f32.mrb[0].mxu0
    %v550 = vadd.f32 %v33, %v549
    %v551 = vpop.f32.mrb[0].mxu0
    %v552 = vpop.f32.mrb[0].mxu0
    %v553 = vadd.f32 %v38, %v552
    %v554 = vpop.f32.mrb[0].mxu0
    %555 = vdwg.mxu0
    %v556 = vmax.f32 %v550, 0.0
    %v557 = vmax.f32 %v553, 0.0
    %v558 = vpack.c.bf16 %v557, %v556
    %559 = vmatprep.subr.bf16.mxu0 0
    %560 = vmatpush1.bf16.msra.mxu0 %v558
    %561 = vmatprep.subr.bf16.mxu0 0
    %562 = vmatpush1.bf16.msra.mxu0 0
    %563 = vmatprep.subr.bf16.mxu0 0
    %564 = vmatpush1.bf16.msra.mxu0 0
    %565 = vmatprep.subr.bf16.mxu0 0
    %566 = vmatpush1.bf16.msra.mxu0 0
    %567 = vmatprep.subr.bf16.mxu0 0
    %568 = vmatpush1.bf16.msra.mxu0 0
    %569 = vmatprep.subr.bf16.mxu0 0
    %570 = vmatpush1.bf16.msra.mxu0 0
    %571 = vmatprep.subr.bf16.mxu0 0
    %572 = vmatpush1.bf16.msra.mxu0 0
    %573 = vmatprep.subr.bf16.mxu0 0
    %574 = vmatpush1.bf16.msra.mxu0 0
    %575 = vmatprep.subr.bf16.mxu0 0
    %576 = vmatpush1.bf16.msra.mxu0 0
    %577 = vmatprep.subr.bf16.mxu0 0
    %578 = vmatpush1.bf16.msra.mxu0 0
    %579 = vmatprep.subr.bf16.mxu0 0
    %580 = vmatpush1.bf16.msra.mxu0 0
    %581 = vmatprep.subr.bf16.mxu0 0
    %582 = vmatpush1.bf16.msra.mxu0 0
    %583 = vmatprep.subr.bf16.mxu0 0
    %584 = vmatpush1.bf16.msra.mxu0 0
    %585 = vmatprep.subr.bf16.mxu0 0
    %586 = vmatpush1.bf16.msra.mxu0 0
    %587 = vmatprep.subr.bf16.mxu0 0
    %588 = vmatpush1.bf16.msra.mxu0 0
    %589 = vmatprep.subr.bf16.mxu0 0
    %590 = vmatpush1.bf16.msra.mxu0 0
    %591 = vmatprep.mubr.bf16.mxu0 0
    %592 = vmatmul.mubr.bf16.gmra.mrb[0].mxu0 %v134
    %v593 = vpop.f32.mrb[0].mxu0
    %v594 = vadd.f32 %v47, %v593
    %v595 = vpop.f32.mrb[0].mxu0
    %v596 = vpop.f32.mrb[0].mxu0
    %v597 = vadd.f32 %v52, %v596
    %v598 = vpop.f32.mrb[0].mxu0
    %599 = vmatprep.mubr.bf16.mxu0 0
    %600 = vmatmul.mubr.bf16.gmra.mrb[0].mxu0 %v137
    %v601 = vpop.f32.mrb[0].mxu0
    %v602 = vadd.f32 %v57, %v601
    %v603 = vpop.f32.mrb[0].mxu0
    %v604 = vpop.f32.mrb[0].mxu0
    %v605 = vadd.f32 %v62, %v604
    %v606 = vpop.f32.mrb[0].mxu0
    %607 = vdwg.mxu0
    %v608 = vmax.f32 %v594, 0.0
    %v609 = vmax.f32 %v597, 0.0
    %v610 = vmax.f32 %v602, 0.0
    %v611 = vmax.f32 %v605, 0.0
    %v612 = vmax.f32 %v506, %v608
    %v613 = vmax.f32 %v507, %v609
    %v614 = vmax.f32 %v508, %v610
    %v615 = vmax.f32 %v509, %v611
    %s616 = scalar_lea.vmem %s0, 20
    %v617 = vld [vmem:[%s616] sm:$0xf]
    %v619 = vsel %vm74, %v617, 0
    %621 = vmatprep.subr.bf16.mxu0 0
    %622 = vmatpush1.bf16.msra.mxu0 %v619
    %623 = vmatprep.subr.bf16.mxu0 0
    %624 = vmatpush1.bf16.msra.mxu0 0
    %625 = vmatprep.subr.bf16.mxu0 0
    %626 = vmatpush1.bf16.msra.mxu0 0
    %627 = vmatprep.subr.bf16.mxu0 0
    %628 = vmatpush1.bf16.msra.mxu0 0
    %629 = vmatprep.subr.bf16.mxu0 0
    %630 = vmatpush1.bf16.msra.mxu0 0
    %631 = vmatprep.subr.bf16.mxu0 0
    %632 = vmatpush1.bf16.msra.mxu0 0
    %633 = vmatprep.subr.bf16.mxu0 0
    %634 = vmatpush1.bf16.msra.mxu0 0
    %635 = vmatprep.subr.bf16.mxu0 0
    %636 = vmatpush1.bf16.msra.mxu0 0
    %637 = vmatprep.subr.bf16.mxu0 0
    %638 = vmatpush1.bf16.msra.mxu0 0
    %639 = vmatprep.subr.bf16.mxu0 0
    %640 = vmatpush1.bf16.msra.mxu0 0
    %641 = vmatprep.subr.bf16.mxu0 0
    %642 = vmatpush1.bf16.msra.mxu0 0
    %643 = vmatprep.subr.bf16.mxu0 0
    %644 = vmatpush1.bf16.msra.mxu0 0
    %645 = vmatprep.subr.bf16.mxu0 0
    %646 = vmatpush1.bf16.msra.mxu0 0
    %647 = vmatprep.subr.bf16.mxu0 0
    %648 = vmatpush1.bf16.msra.mxu0 0
    %649 = vmatprep.subr.bf16.mxu0 0
    %650 = vmatpush1.bf16.msra.mxu0 0
    %651 = vmatprep.subr.bf16.mxu0 0
    %652 = vmatpush1.bf16.msra.mxu0 0
    %653 = vmatprep.mubr.bf16.mxu0 0
    %654 = vmatmul.mubr.bf16.gmra.mrb[0].mxu0 %v72
    %v655 = vpop.f32.mrb[0].mxu0
    %v656 = vadd.f32 %v33, %v655
    %v657 = vpop.f32.mrb[0].mxu0
    %v658 = vpop.f32.mrb[0].mxu0
    %v659 = vadd.f32 %v38, %v658
    %v660 = vpop.f32.mrb[0].mxu0
    %661 = vdwg.mxu0
    %v662 = vmax.f32 %v656, 0.0
    %v663 = vmax.f32 %v659, 0.0
    %v664 = vpack.c.bf16 %v663, %v662
    %665 = vmatprep.subr.bf16.mxu0 0
    %666 = vmatpush1.bf16.msra.mxu0 %v664
    %667 = vmatprep.subr.bf16.mxu0 0
    %668 = vmatpush1.bf16.msra.mxu0 0
    %669 = vmatprep.subr.bf16.mxu0 0
    %670 = vmatpush1.bf16.msra.mxu0 0
    %671 = vmatprep.subr.bf16.mxu0 0
    %672 = vmatpush1.bf16.msra.mxu0 0
    %673 = vmatprep.subr.bf16.mxu0 0
    %674 = vmatpush1.bf16.msra.mxu0 0
    %675 = vmatprep.subr.bf16.mxu0 0
    %676 = vmatpush1.bf16.msra.mxu0 0
    %677 = vmatprep.subr.bf16.mxu0 0
    %678 = vmatpush1.bf16.msra.mxu0 0
    %679 = vmatprep.subr.bf16.mxu0 0
    %680 = vmatpush1.bf16.msra.mxu0 0
    %681 = vmatprep.subr.bf16.mxu0 0
    %682 = vmatpush1.bf16.msra.mxu0 0
    %683 = vmatprep.subr.bf16.mxu0 0
    %684 = vmatpush1.bf16.msra.mxu0 0
    %685 = vmatprep.subr.bf16.mxu0 0
    %686 = vmatpush1.bf16.msra.mxu0 0
    %687 = vmatprep.subr.bf16.mxu0 0
    %688 = vmatpush1.bf16.msra.mxu0 0
    %689 = vmatprep.subr.bf16.mxu0 0
    %690 = vmatpush1.bf16.msra.mxu0 0
    %691 = vmatprep.subr.bf16.mxu0 0
    %692 = vmatpush1.bf16.msra.mxu0 0
    %693 = vmatprep.subr.bf16.mxu0 0
    %694 = vmatpush1.bf16.msra.mxu0 0
    %695 = vmatprep.subr.bf16.mxu0 0
    %696 = vmatpush1.bf16.msra.mxu0 0
    %697 = vmatprep.mubr.bf16.mxu0 0
    %698 = vmatmul.mubr.bf16.gmra.mrb[0].mxu0 %v134
    %v699 = vpop.f32.mrb[0].mxu0
    %v700 = vadd.f32 %v47, %v699
    %v701 = vpop.f32.mrb[0].mxu0
    %v702 = vpop.f32.mrb[0].mxu0
    %v703 = vadd.f32 %v52, %v702
    %v704 = vpop.f32.mrb[0].mxu0
    %705 = vmatprep.mubr.bf16.mxu0 0
    %706 = vmatmul.mubr.bf16.gmra.mrb[0].mxu0 %v137
    %v707 = vpop.f32.mrb[0].mxu0
    %v708 = vadd.f32 %v57, %v707
    %v709 = vpop.f32.mrb[0].mxu0
    %v710 = vpop.f32.mrb[0].mxu0
    %v711 = vadd.f32 %v62, %v710
    %v712 = vpop.f32.mrb[0].mxu0
    %713 = vdwg.mxu0
    %v714 = vmax.f32 %v700, 0.0
    %v715 = vmax.f32 %v703, 0.0
    %v716 = vmax.f32 %v708, 0.0
    %v717 = vmax.f32 %v711, 0.0
    %v718 = vmax.f32 %v612, %v714
    %v719 = vmax.f32 %v613, %v715
    %v720 = vmax.f32 %v614, %v716
    %v721 = vmax.f32 %v615, %v717
    %s722 = scalar_lea.vmem %s0, 24
    %v723 = vld [vmem:[%s722] sm:$0xf]
    %v725 = vsel %vm74, %v723, 0
    %727 = vmatprep.subr.bf16.mxu0 0
    %728 = vmatpush1.bf16.msra.mxu0 %v725
    %729 = vmatprep.subr.bf16.mxu0 0
    %730 = vmatpush1.bf16.msra.mxu0 0
    %731 = vmatprep.subr.bf16.mxu0 0
    %732 = vmatpush1.bf16.msra.mxu0 0
    %733 = vmatprep.subr.bf16.mxu0 0
    %734 = vmatpush1.bf16.msra.mxu0 0
    %735 = vmatprep.subr.bf16.mxu0 0
    %736 = vmatpush1.bf16.msra.mxu0 0
    %737 = vmatprep.subr.bf16.mxu0 0
    %738 = vmatpush1.bf16.msra.mxu0 0
    %739 = vmatprep.subr.bf16.mxu0 0
    %740 = vmatpush1.bf16.msra.mxu0 0
    %741 = vmatprep.subr.bf16.mxu0 0
    %742 = vmatpush1.bf16.msra.mxu0 0
    %743 = vmatprep.subr.bf16.mxu0 0
    %744 = vmatpush1.bf16.msra.mxu0 0
    %745 = vmatprep.subr.bf16.mxu0 0
    %746 = vmatpush1.bf16.msra.mxu0 0
    %747 = vmatprep.subr.bf16.mxu0 0
    %748 = vmatpush1.bf16.msra.mxu0 0
    %749 = vmatprep.subr.bf16.mxu0 0
    %750 = vmatpush1.bf16.msra.mxu0 0
    %751 = vmatprep.subr.bf16.mxu0 0
    %752 = vmatpush1.bf16.msra.mxu0 0
    %753 = vmatprep.subr.bf16.mxu0 0
    %754 = vmatpush1.bf16.msra.mxu0 0
    %755 = vmatprep.subr.bf16.mxu0 0
    %756 = vmatpush1.bf16.msra.mxu0 0
    %757 = vmatprep.subr.bf16.mxu0 0
    %758 = vmatpush1.bf16.msra.mxu0 0
    %759 = vmatprep.mubr.bf16.mxu0 0
    %760 = vmatmul.mubr.bf16.gmra.mrb[0].mxu0 %v72
    %v761 = vpop.f32.mrb[0].mxu0
    %v762 = vadd.f32 %v33, %v761
    %v763 = vpop.f32.mrb[0].mxu0
    %v764 = vpop.f32.mrb[0].mxu0
    %v765 = vadd.f32 %v38, %v764
    %v766 = vpop.f32.mrb[0].mxu0
    %767 = vdwg.mxu0
    %v768 = vmax.f32 %v762, 0.0
    %v769 = vmax.f32 %v765, 0.0
    %v770 = vpack.c.bf16 %v769, %v768
    %771 = vmatprep.subr.bf16.mxu0 0
    %772 = vmatpush1.bf16.msra.mxu0 %v770
    %773 = vmatprep.subr.bf16.mxu0 0
    %774 = vmatpush1.bf16.msra.mxu0 0
    %775 = vmatprep.subr.bf16.mxu0 0
    %776 = vmatpush1.bf16.msra.mxu0 0
    %777 = vmatprep.subr.bf16.mxu0 0
    %778 = vmatpush1.bf16.msra.mxu0 0
    %779 = vmatprep.subr.bf16.mxu0 0
    %780 = vmatpush1.bf16.msra.mxu0 0
    %781 = vmatprep.subr.bf16.mxu0 0
    %782 = vmatpush1.bf16.msra.mxu0 0
    %783 = vmatprep.subr.bf16.mxu0 0
    %784 = vmatpush1.bf16.msra.mxu0 0
    %785 = vmatprep.subr.bf16.mxu0 0
    %786 = vmatpush1.bf16.msra.mxu0 0
    %787 = vmatprep.subr.bf16.mxu0 0
    %788 = vmatpush1.bf16.msra.mxu0 0
    %789 = vmatprep.subr.bf16.mxu0 0
    %790 = vmatpush1.bf16.msra.mxu0 0
    %791 = vmatprep.subr.bf16.mxu0 0
    %792 = vmatpush1.bf16.msra.mxu0 0
    %793 = vmatprep.subr.bf16.mxu0 0
    %794 = vmatpush1.bf16.msra.mxu0 0
    %795 = vmatprep.subr.bf16.mxu0 0
    %796 = vmatpush1.bf16.msra.mxu0 0
    %797 = vmatprep.subr.bf16.mxu0 0
    %798 = vmatpush1.bf16.msra.mxu0 0
    %799 = vmatprep.subr.bf16.mxu0 0
    %800 = vmatpush1.bf16.msra.mxu0 0
    %801 = vmatprep.subr.bf16.mxu0 0
    %802 = vmatpush1.bf16.msra.mxu0 0
    %803 = vmatprep.mubr.bf16.mxu0 0
    %804 = vmatmul.mubr.bf16.gmra.mrb[0].mxu0 %v134
    %v805 = vpop.f32.mrb[0].mxu0
    %v806 = vadd.f32 %v47, %v805
    %v807 = vpop.f32.mrb[0].mxu0
    %v808 = vpop.f32.mrb[0].mxu0
    %v809 = vadd.f32 %v52, %v808
    %v810 = vpop.f32.mrb[0].mxu0
    %811 = vmatprep.mubr.bf16.mxu0 0
    %812 = vmatmul.mubr.bf16.gmra.mrb[0].mxu0 %v137
    %v813 = vpop.f32.mrb[0].mxu0
    %v814 = vadd.f32 %v57, %v813
    %v815 = vpop.f32.mrb[0].mxu0
    %v816 = vpop.f32.mrb[0].mxu0
    %v817 = vadd.f32 %v62, %v816
    %v818 = vpop.f32.mrb[0].mxu0
    %819 = vdwg.mxu0
    %v820 = vmax.f32 %v806, 0.0
    %v821 = vmax.f32 %v809, 0.0
    %v822 = vmax.f32 %v814, 0.0
    %v823 = vmax.f32 %v817, 0.0
    %v824 = vmax.f32 %v718, %v820
    %v825 = vmax.f32 %v719, %v821
    %v826 = vmax.f32 %v720, %v822
    %v827 = vmax.f32 %v721, %v823
    %s828 = scalar_lea.vmem %s0, 28
    %v829 = vld [vmem:[%s828] sm:$0xf]
    %v831 = vsel %vm74, %v829, 0
    %833 = vmatprep.subr.bf16.mxu0 0
    %834 = vmatpush1.bf16.msra.mxu0 %v831
    %835 = vmatprep.subr.bf16.mxu0 0
    %836 = vmatpush1.bf16.msra.mxu0 0
    %837 = vmatprep.subr.bf16.mxu0 0
    %838 = vmatpush1.bf16.msra.mxu0 0
    %839 = vmatprep.subr.bf16.mxu0 0
    %840 = vmatpush1.bf16.msra.mxu0 0
    %841 = vmatprep.subr.bf16.mxu0 0
    %842 = vmatpush1.bf16.msra.mxu0 0
    %843 = vmatprep.subr.bf16.mxu0 0
    %844 = vmatpush1.bf16.msra.mxu0 0
    %845 = vmatprep.subr.bf16.mxu0 0
    %846 = vmatpush1.bf16.msra.mxu0 0
    %847 = vmatprep.subr.bf16.mxu0 0
    %848 = vmatpush1.bf16.msra.mxu0 0
    %849 = vmatprep.subr.bf16.mxu0 0
    %850 = vmatpush1.bf16.msra.mxu0 0
    %851 = vmatprep.subr.bf16.mxu0 0
    %852 = vmatpush1.bf16.msra.mxu0 0
    %853 = vmatprep.subr.bf16.mxu0 0
    %854 = vmatpush1.bf16.msra.mxu0 0
    %855 = vmatprep.subr.bf16.mxu0 0
    %856 = vmatpush1.bf16.msra.mxu0 0
    %857 = vmatprep.subr.bf16.mxu0 0
    %858 = vmatpush1.bf16.msra.mxu0 0
    %859 = vmatprep.subr.bf16.mxu0 0
    %860 = vmatpush1.bf16.msra.mxu0 0
    %861 = vmatprep.subr.bf16.mxu0 0
    %862 = vmatpush1.bf16.msra.mxu0 0
    %863 = vmatprep.subr.bf16.mxu0 0
    %864 = vmatpush1.bf16.msra.mxu0 0
    %865 = vmatprep.mubr.bf16.mxu0 0
    %866 = vmatmul.mubr.bf16.gmra.mrb[0].mxu0 %v72
    %v867 = vpop.f32.mrb[0].mxu0
    %v868 = vadd.f32 %v33, %v867
    %v869 = vpop.f32.mrb[0].mxu0
    %v870 = vpop.f32.mrb[0].mxu0
    %v871 = vadd.f32 %v38, %v870
    %v872 = vpop.f32.mrb[0].mxu0
    %873 = vdwg.mxu0
    %v874 = vmax.f32 %v868, 0.0
    %v875 = vmax.f32 %v871, 0.0
    %v876 = vpack.c.bf16 %v875, %v874
    %877 = vmatprep.subr.bf16.mxu0 0
    %878 = vmatpush1.bf16.msra.mxu0 %v876
    %879 = vmatprep.subr.bf16.mxu0 0
    %880 = vmatpush1.bf16.msra.mxu0 0
    %881 = vmatprep.subr.bf16.mxu0 0
    %882 = vmatpush1.bf16.msra.mxu0 0
    %883 = vmatprep.subr.bf16.mxu0 0
    %884 = vmatpush1.bf16.msra.mxu0 0
    %885 = vmatprep.subr.bf16.mxu0 0
    %886 = vmatpush1.bf16.msra.mxu0 0
    %887 = vmatprep.subr.bf16.mxu0 0
    %888 = vmatpush1.bf16.msra.mxu0 0
    %889 = vmatprep.subr.bf16.mxu0 0
    %890 = vmatpush1.bf16.msra.mxu0 0
    %891 = vmatprep.subr.bf16.mxu0 0
    %892 = vmatpush1.bf16.msra.mxu0 0
    %893 = vmatprep.subr.bf16.mxu0 0
    %894 = vmatpush1.bf16.msra.mxu0 0
    %895 = vmatprep.subr.bf16.mxu0 0
    %896 = vmatpush1.bf16.msra.mxu0 0
    %897 = vmatprep.subr.bf16.mxu0 0
    %898 = vmatpush1.bf16.msra.mxu0 0
    %899 = vmatprep.subr.bf16.mxu0 0
    %900 = vmatpush1.bf16.msra.mxu0 0
    %901 = vmatprep.subr.bf16.mxu0 0
    %902 = vmatpush1.bf16.msra.mxu0 0
    %903 = vmatprep.subr.bf16.mxu0 0
    %904 = vmatpush1.bf16.msra.mxu0 0
    %905 = vmatprep.subr.bf16.mxu0 0
    %906 = vmatpush1.bf16.msra.mxu0 0
    %907 = vmatprep.subr.bf16.mxu0 0
    %908 = vmatpush1.bf16.msra.mxu0 0
    %909 = vmatprep.mubr.bf16.mxu0 0
    %910 = vmatmul.mubr.bf16.gmra.mrb[0].mxu0 %v134
    %v911 = vpop.f32.mrb[0].mxu0
    %v912 = vadd.f32 %v47, %v911
    %v913 = vpop.f32.mrb[0].mxu0
    %v914 = vpop.f32.mrb[0].mxu0
    %v915 = vadd.f32 %v52, %v914
    %v916 = vpop.f32.mrb[0].mxu0
    %917 = vmatprep.mubr.bf16.mxu0 0
    %918 = vmatmul.mubr.bf16.gmra.mrb[0].mxu0 %v137
    %v919 = vpop.f32.mrb[0].mxu0
    %v920 = vadd.f32 %v57, %v919
    %v921 = vpop.f32.mrb[0].mxu0
    %v922 = vpop.f32.mrb[0].mxu0
    %v923 = vadd.f32 %v62, %v922
    %v924 = vpop.f32.mrb[0].mxu0
    %925 = vdwg.mxu0
    %v926 = vmax.f32 %v912, 0.0
    %v927 = vmax.f32 %v915, 0.0
    %v928 = vmax.f32 %v920, 0.0
    %v929 = vmax.f32 %v923, 0.0
    %v930 = vmax.f32 %v824, %v926
    %v931 = vmax.f32 %v825, %v927
    %v932 = vmax.f32 %v826, %v928
    %v933 = vmax.f32 %v827, %v929
    %v934 = vpack.c.bf16 %v931, %v930
    %v935 = vpack.c.bf16 %v933, %v932
    %v938 = vunpack.c.l.b16 %v934
    %v939 = vunpack.c.h.b16 %v934
    %v940 = vunpack.c.l.b16 %v935
    %v941 = vunpack.c.h.b16 %v935
    %v942 = vpack.c.b16 %v938, %v938
    %v943 = vpack.c.b16 %v939, %v939
    %v944 = vpack.c.b16 %v940, %v940
    %v945 = vpack.c.b16 %v941, %v941
    %950 = vst [vmem:[#allocation2] sm:$0xf] %v942
    %951 = vst [vmem:[#allocation2 + $0x4] sm:$0xf] %v943
    %952 = vst [vmem:[#allocation2 + $0x8] sm:$0xf] %v944
    %953 = vst [vmem:[#allocation2 + $0xc] sm:$0xf] %v945
    // Predicated region
    $region22: #{tpu_custom_call.1} parent=1 // pred_check
      _
    $region23: #{tpu_custom_call.1} parent=1 // pred_check_branch
      %955 = sbr.rel (0) target = $region25
    $region24: #{tpu_custom_call.1} parent=1 // pred_region
      %s957 = ssub.s32 256, 256
      %958 = vsyncadd [#allocation3], %s957
      %s959 = sshll.u32 [#allocation2], 4
      %s960 = int_to_ptr.vmem [resolvable:$true] %s959
      %965 = dma.vmem_to_hbm [thread:$0]  %s960, 256, %s5, [#allocation3], 64, 64, 4
    $region25: #{tpu_custom_call.1} parent=1 // pred_fallthru
      _
    // Predicated region
    $region26: #{tpu_custom_call.1} parent=1 // pred_check
      _
    $region27: #{tpu_custom_call.1} parent=1 // pred_check_branch
      %967 = sbr.rel (0) target = $region29
    $region28: #{tpu_custom_call.1} parent=1 // pred_region
      %968 = dma.done [#allocation3], 256
    $region29: #{tpu_custom_call.1} parent=1 // pred_fallthru
      _
    %969 = vsyncpa [#allocation3], 1

</llo_original>
